<compile_context>
chip_gen: v7x
topology: tpu7x:2x2x1
jax: 0.10.0
libtpu: 0.0.40
codegen_flags: <defaults>
</compile_context>

<pallas_src>
import numpy as np
import jax
import jax.numpy as jnp
from jax.experimental import pallas as pl
from jax.experimental.pallas import tpu as pltpu

# ---- hyperparameters (small shapes consistent with the module) ----
vocab_size        = 16
embedding_size    = 8
sequence_length   = 8
num_filters       = 4
filter_sizes      = (2, 3, 4)
num_classes       = 2
num_filters_total = num_filters * len(filter_sizes)
batch             = 2

LANES  = 128                              # lane-dense packed width
NF_PAD = 16                               # filters padded 12 -> 16 per position
L_PAD  = LANES // NF_PAD                  # 8 conv-position slots (7 used at most)
K_OH   = sequence_length * vocab_size     # one-hot reduction width

assert K_OH == LANES, "one-hot width must fill the 128 lanes at these toy shapes"
assert L_PAD >= sequence_length - min(filter_sizes) + 1
assert NF_PAD >= num_filters_total


def textcnn_kernel(x_ref, cbig_ref, aux_ref, wout_ref, out_ref):
    """one-hot build -> fused gather+im2col+conv matmul -> ReLU+mask -> max-pool -> linear."""
    ids = x_ref[...]                                              # [B_PAD, 128] int32
    lane = jax.lax.broadcasted_iota(jnp.int32, ids.shape, 1)
    onehot = (ids == lane % vocab_size).astype(jnp.float32)       # [B_PAD, 128]

    # gather + im2col + all three convs in ONE MXU push (columns = l*NF_PAD + f)
    conv = jnp.dot(onehot, cbig_ref[...],
                   preferred_element_type=jnp.float32)            # [B_PAD, 128]

    b_conv = aux_ref[0:1, :]     # conv bias replicated over the l blocks
    v_mask = aux_ref[1:2, :]     # 1.0 where (real filter) & (l < valid conv length)
    b_out  = aux_ref[2:3, :]     # final Bias (lanes 0..num_classes-1)

    h = jnp.maximum(conv + b_conv, 0.0) * v_mask                  # ReLU + valid mask

    # MaxPool2d((L_i, 1)) for all filter groups at once: max over the l slots.
    pooled = h[:, 0:NF_PAD]
    for l in range(1, L_PAD):
        pooled = jnp.maximum(pooled, h[:, l * NF_PAD:(l + 1) * NF_PAD])   # [B_PAD, 16]

    # permute + cat + reshape of the PyTorch code collapse to: pooled lanes are
    # already ordered [group0 filters | group1 | group2 | zero-pad].
    logits = jnp.dot(pooled, wout_ref[...],
                     preferred_element_type=jnp.float32)          # [B_PAD, 128]
    out_ref[...] = logits + b_out                                 # full unmasked vst


def pack_params(params):
    """Fold embedding table + conv weights into one matmul operand (host, once)."""
    table = np.asarray(params["emb"], np.float32)                 # [vocab, E]
    cbig  = np.zeros((K_OH, LANES), np.float32)                   # [128, 128]
    aux   = np.zeros((8, LANES), np.float32)                      # bias / mask / Bias rows
    wout2 = np.zeros((NF_PAD, LANES), np.float32)                 # [16, 128]

    for i, fs in enumerate(filter_sizes):
        w = np.asarray(params["conv_w"][i], np.float32)           # [fs, E, F]
        b = np.asarray(params["conv_b"][i], np.float32).reshape(-1)
        l_valid = sequence_length - fs + 1
        f_lo = i * num_filters
        for l in range(l_valid):
            for k in range(fs):
                s = l + k                                         # source token position
                cbig[s * vocab_size:(s + 1) * vocab_size,
                     l * NF_PAD + f_lo:l * NF_PAD + f_lo + num_filters] = table @ w[k]
        for l in range(L_PAD):
            aux[0, l * NF_PAD + f_lo:l * NF_PAD + f_lo + num_filters] = b
            if l < l_valid:
                aux[1, l * NF_PAD + f_lo:l * NF_PAD + f_lo + num_filters] = 1.0

    aux[2, :num_classes] = np.asarray(params["bias"], np.float32).reshape(-1)
    wout2[:num_filters_total, :num_classes] = np.asarray(params["wout"], np.float32)
    return jnp.asarray(cbig), jnp.asarray(aux), jnp.asarray(wout2)


def textcnn_forward(X, packed):
    cbig, aux, wout2 = packed
    B = X.shape[0]
    b_pad = ((B + 7) // 8) * 8                                    # sublane-dense batch

    # Index plumbing only (ints, [B,8] -> [B,128]): repeat each token id across
    # its vocab lane block so the kernel builds the one-hot with one iota compare.
    x_rep = jnp.repeat(X.astype(jnp.int32), vocab_size, axis=1)   # [B, 128]
    x_pad = jnp.full((b_pad, LANES), -1, jnp.int32).at[:B, :].set(x_rep)

    cost = pl.CostEstimate(
        flops=2 * b_pad * LANES * LANES + 2 * b_pad * NF_PAD * LANES,
        transcendentals=0,
        bytes_accessed=4 * (2 * b_pad * LANES + LANES * LANES
                            + 8 * LANES + NF_PAD * LANES))

    vmem = pl.BlockSpec(memory_space=pltpu.MemorySpace.VMEM)
    out = pl.pallas_call(
        textcnn_kernel,
        out_shape=jax.ShapeDtypeStruct((b_pad, LANES), jnp.float32),
        in_specs=[vmem, vmem, vmem, vmem],
        out_specs=vmem,
        cost_estimate=cost,
        # Single VMEM-resident invocation: at these KB-scale shapes any grid
        # splitting is pure overhead.  If batch grows, add a batch grid axis with
        # dimension_semantics=("parallel",) so v7x's two TensorCores split it.
    )(x_pad, cbig, aux, wout2)
    return out[:B, :num_classes]                                  # drop padding


def textcnn_reference(X, params):
    """Pure-JAX reference mirroring the PyTorch forward pass (unpacked params)."""
    emb = params["emb"][X].astype(jnp.float32)                    # [B, S, E]
    pooled_parts = []
    for i, fs in enumerate(filter_sizes):
        L = sequence_length - fs + 1
        w = params["conv_w"][i]                                   # [fs, E, F]
        b = params["conv_b"][i]                                   # [1, F]
        acc = jnp.zeros((emb.shape[0], L, num_filters), jnp.float32)
        for k in range(fs):
            acc = acc + jnp.einsum("ble,ef->blf", emb[:, k:k + L, :], w[k])
        h = jnp.maximum(acc + b[None, :, :], 0.0)
        pooled_parts.append(jnp.max(h, axis=1))
    h_pool = jnp.concatenate(pooled_parts, axis=-1)
    return h_pool @ params["wout"] + params["bias"]


def init_params(key):
    keys = jax.random.split(key, 3 + 2 * len(filter_sizes))
    params = {
        "emb": jax.random.normal(keys[0], (vocab_size, embedding_size),
                                 jnp.float32) * 0.1,
        "conv_w": [], "conv_b": [],
        # nn.Linear(num_filters_total, num_classes, bias=False): stored as W.T
        "wout": jax.random.normal(keys[1], (num_filters_total, num_classes),
                                  jnp.float32) * 0.1,
        # self.Bias = nn.Parameter(torch.ones([num_classes]))
        "bias": jnp.ones((1, num_classes), jnp.float32),
    }
    for i, fs in enumerate(filter_sizes):
        kw, kb = keys[3 + 2 * i], keys[4 + 2 * i]
        params["conv_w"].append(
            jax.random.normal(kw, (fs, embedding_size, num_filters),
                              jnp.float32) * 0.1)
        params["conv_b"].append(
            jax.random.normal(kb, (1, num_filters), jnp.float32) * 0.1)
    return params


if __name__ == "__main__":
    key = jax.random.PRNGKey(0)
    k_params, k_x = jax.random.split(key)
    params = init_params(k_params)
    packed = pack_params(params)
    X = jax.random.randint(k_x, (batch, sequence_length), 0, vocab_size,
                           dtype=jnp.int32)

    fwd = jax.jit(textcnn_forward)
    out = jax.block_until_ready(fwd(X, packed))
    ref = jax.block_until_ready(textcnn_reference(X, params))

    assert out.shape == (batch, num_classes), out.shape
    assert jnp.allclose(out, ref, atol=1e-5, rtol=1e-5), (out, ref)
    print("KERNEL_OK")
</pallas_src>

<mosaic_0001>
module attributes {stable_mosaic.version = 11 : i64} {
  func.func @textcnn_kernel(%arg0: memref<8x128xi32, #tpu.memory_space<vmem>>, %arg1: memref<128x128xf32, #tpu.memory_space<vmem>>, %arg2: memref<8x128xf32, #tpu.memory_space<vmem>>, %arg3: memref<16x128xf32, #tpu.memory_space<vmem>>, %arg4: memref<8x128xf32, #tpu.memory_space<vmem>>) attributes {dimension_semantics = [], scalar_prefetch = 0 : i64, scratch_operands = 0 : i64, tpu.core_type = #tpu.core_type<tc>} {
    %c0 = arith.constant 0 : index
    %c0_0 = arith.constant 0 : index
    %0 = vector.load %arg0[%c0, %c0_0] : memref<8x128xi32, #tpu.memory_space<vmem>>, vector<8x128xi32>
    %1 = tpu.iota {dimensions = array<i32: 1>} : vector<8x128xi32>
    %c16_i32 = arith.constant 16 : i32
    %c0_i32 = arith.constant 0 : i32
    %2 = arith.cmpi eq, %c16_i32, %c0_i32 : i32
    %c1_i32 = arith.constant 1 : i32
    %3 = arith.select %2, %c1_i32, %c16_i32 : i32
    %4 = vector.broadcast %3 : i32 to vector<8x128xi32>
    %5 = arith.remsi %1, %4 : vector<8x128xi32>
    %c0_i32_1 = arith.constant 0 : i32
    %6 = vector.broadcast %c0_i32_1 : i32 to vector<8x128xi32>
    %7 = arith.cmpi ne, %5, %6 : vector<8x128xi32>
    %c0_i32_2 = arith.constant 0 : i32
    %8 = vector.broadcast %c0_i32_2 : i32 to vector<8x128xi32>
    %9 = arith.cmpi slt, %5, %8 : vector<8x128xi32>
    %c0_i32_3 = arith.constant 0 : i32
    %10 = arith.cmpi slt, %3, %c0_i32_3 : i32
    %11 = vector.broadcast %10 : i1 to vector<8x128xi1>
    %12 = vector.broadcast %11 : vector<8x128xi1> to vector<8x128xi1>
    %13 = arith.xori %9, %12 : vector<8x128xi1>
    %14 = arith.andi %13, %7 : vector<8x128xi1>
    %15 = vector.broadcast %3 : i32 to vector<8x128xi32>
    %16 = arith.addi %5, %15 : vector<8x128xi32>
    %17 = arith.select %14, %16, %5 : vector<8x128xi1>, vector<8x128xi32>
    %18 = arith.cmpi eq, %0, %17 : vector<8x128xi32>
    %19 = arith.extui %18 : vector<8x128xi1> to vector<8x128xi32>
    %20 = arith.sitofp %19 : vector<8x128xi32> to vector<8x128xf32>
    %c0_4 = arith.constant 0 : index
    %c0_5 = arith.constant 0 : index
    %21 = vector.load %arg1[%c0_4, %c0_5] : memref<128x128xf32, #tpu.memory_space<vmem>>, vector<128x128xf32>
    %cst = arith.constant dense<0.000000e+00> : vector<8x128xf32>
    %22 = tpu.matmul %20, %21, %cst {dimension_numbers = #tpu.dot_dimension_numbers<[1], [0], [0], [1], [0, 0, 1, 1], [], []>} : vector<8x128xf32>, vector<128x128xf32>, vector<8x128xf32> -> vector<8x128xf32>
    %c0_6 = arith.constant 0 : index
    %c0_7 = arith.constant 0 : index
    %23 = vector.load %arg2[%c0_6, %c0_7] : memref<8x128xf32, #tpu.memory_space<vmem>>, vector<1x128xf32>
    %c1 = arith.constant 1 : index
    %c0_8 = arith.constant 0 : index
    %24 = vector.load %arg2[%c1, %c0_8] : memref<8x128xf32, #tpu.memory_space<vmem>>, vector<1x128xf32>
    %c2 = arith.constant 2 : index
    %c0_9 = arith.constant 0 : index
    %25 = vector.load %arg2[%c2, %c0_9] : memref<8x128xf32, #tpu.memory_space<vmem>>, vector<1x128xf32>
    %26 = vector.broadcast %23 : vector<1x128xf32> to vector<8x128xf32>
    %27 = arith.addf %22, %26 : vector<8x128xf32>
    %cst_10 = arith.constant 0.000000e+00 : f32
    %28 = vector.broadcast %cst_10 : f32 to vector<8x128xf32>
    %29 = arith.maximumf %27, %28 : vector<8x128xf32>
    %30 = vector.broadcast %24 : vector<1x128xf32> to vector<8x128xf32>
    %31 = arith.mulf %29, %30 : vector<8x128xf32>
    %32 = vector.extract_strided_slice %31 {offsets = [0, 0], sizes = [8, 16], strides = [1, 1]} : vector<8x128xf32> to vector<8x16xf32>
    %33 = vector.extract_strided_slice %31 {offsets = [0, 16], sizes = [8, 16], strides = [1, 1]} : vector<8x128xf32> to vector<8x16xf32>
    %34 = arith.maximumf %32, %33 : vector<8x16xf32>
    %35 = vector.extract_strided_slice %31 {offsets = [0, 32], sizes = [8, 16], strides = [1, 1]} : vector<8x128xf32> to vector<8x16xf32>
    %36 = arith.maximumf %34, %35 : vector<8x16xf32>
    %37 = vector.extract_strided_slice %31 {offsets = [0, 48], sizes = [8, 16], strides = [1, 1]} : vector<8x128xf32> to vector<8x16xf32>
    %38 = arith.maximumf %36, %37 : vector<8x16xf32>
    %39 = vector.extract_strided_slice %31 {offsets = [0, 64], sizes = [8, 16], strides = [1, 1]} : vector<8x128xf32> to vector<8x16xf32>
    %40 = arith.maximumf %38, %39 : vector<8x16xf32>
    %41 = vector.extract_strided_slice %31 {offsets = [0, 80], sizes = [8, 16], strides = [1, 1]} : vector<8x128xf32> to vector<8x16xf32>
    %42 = arith.maximumf %40, %41 : vector<8x16xf32>
    %43 = vector.extract_strided_slice %31 {offsets = [0, 96], sizes = [8, 16], strides = [1, 1]} : vector<8x128xf32> to vector<8x16xf32>
    %44 = arith.maximumf %42, %43 : vector<8x16xf32>
    %45 = vector.extract_strided_slice %31 {offsets = [0, 112], sizes = [8, 16], strides = [1, 1]} : vector<8x128xf32> to vector<8x16xf32>
    %46 = arith.maximumf %44, %45 : vector<8x16xf32>
    %c0_11 = arith.constant 0 : index
    %c0_12 = arith.constant 0 : index
    %47 = vector.load %arg3[%c0_11, %c0_12] : memref<16x128xf32, #tpu.memory_space<vmem>>, vector<16x128xf32>
    %cst_13 = arith.constant dense<0.000000e+00> : vector<8x128xf32>
    %48 = tpu.matmul %46, %47, %cst_13 {dimension_numbers = #tpu.dot_dimension_numbers<[1], [0], [0], [1], [0, 0, 1, 1], [], []>} : vector<8x16xf32>, vector<16x128xf32>, vector<8x128xf32> -> vector<8x128xf32>
    %49 = vector.broadcast %25 : vector<1x128xf32> to vector<8x128xf32>
    %50 = arith.addf %48, %49 : vector<8x128xf32>
    %c0_14 = arith.constant 0 : index
    %c0_15 = arith.constant 0 : index
    %51 = vector.load %arg4[%c0_14, %c0_15] : memref<8x128xf32, #tpu.memory_space<vmem>>, vector<8x128xf32>
    tpu.vector_store %arg4[%c0_14, %c0_15], %50 {strides = array<i32>} : memref<8x128xf32, #tpu.memory_space<vmem>>, vector<8x128xf32>,
    return
  }
}

</mosaic_0001>

<llo_original>
// kernel: textcnn_forward.1
$region0: #{textcnn_forward.1}
  #allocation0 [shape = 'u32[]', space=smem, size = 0x4, offset = 0x4, fixed_abs, tag = 'smem constant byte address 0x4 - core index']
  #allocation1 [shape = 'u32[144,128]{1,0:T(1,128)}', space=vmem, size = 0x12000, scoped, tag = 'internal scratch']
  %s0 = inlined_call_operand.vmem [shape: s32[8,128], index: 0, kind: input, shape index: {}]
  %s1 = inlined_call_operand.hbm [shape: f32[128,128], index: 1, kind: input, shape index: {}]
  %s2 = inlined_call_operand.vmem [shape: f32[8,128], index: 2, kind: input, shape index: {}]
  %s3 = inlined_call_operand.vmem [shape: f32[16,128], index: 3, kind: input, shape index: {}]
  %s4 = inlined_call_operand.vmem [shape: f32[8,128], index: 4, kind: output, shape index: {}]
  %s5 = sld [smem:[#allocation0]]
  $region30: #{textcnn_forward.1} parent=0
    _
  %s7 = ssub.s32 1, %s5
  %s8 = scalar_select 0, %s7, %s5
  $region1: #{textcnn_forward.1} parent=0
    #allocation2 [shape = 'u8[65536]{0}', space=vmem, size = 0x10000, scoped, tag = 'input window, operand 1, single buffered']
    #allocation3 [shape = 's32[1]{0}', space=sflag, size = 0x4, scoped, tag = 'scoped memory for textcnn_forward.1']
    %9 = vsyncpa [#allocation3], 0
    // Predicated region
    $region2: #{textcnn_forward.1} parent=1 // pred_check
      _
    $region3: #{textcnn_forward.1} parent=1 // pred_check_branch
      %11 = sbr.rel (0) target = $region5
    $region4: #{textcnn_forward.1} parent=1 // pred_region
      _
    $region5: #{textcnn_forward.1} parent=1 // pred_fallthru
      _
    // Predicated region
    $region6: #{textcnn_forward.1} parent=1 // pred_check
      _
    $region7: #{textcnn_forward.1} parent=1 // pred_check_branch
      %13 = sbr.rel (0) target = $region9
    $region8: #{textcnn_forward.1} parent=1 // pred_region
      %s15 = ssub.s32 2048, 2048
      %16 = vsyncadd [#allocation3], %s15
      %s17 = sshll.u32 [#allocation2], 4
      %s18 = int_to_ptr.vmem [resolvable:$true] %s17
      %23 = dma.hbm_to_vmem [thread:$0]  %s1, 2048, %s18, [#allocation3], 128, 128, 8
    $region9: #{textcnn_forward.1} parent=1 // pred_fallthru
      _
    // Predicated region
    $region10: #{textcnn_forward.1} parent=1 // pred_check
      _
    $region11: #{textcnn_forward.1} parent=1 // pred_check_branch
      %25 = sbr.rel (0) target = $region13
    $region12: #{textcnn_forward.1} parent=1 // pred_region
      _
    $region13: #{textcnn_forward.1} parent=1 // pred_fallthru
      _
    // Predicated region
    $region14: #{textcnn_forward.1} parent=1 // pred_check
      _
    $region15: #{textcnn_forward.1} parent=1 // pred_check_branch
      %27 = sbr.rel (0) target = $region17
    $region16: #{textcnn_forward.1} parent=1 // pred_region
      _
    $region17: #{textcnn_forward.1} parent=1 // pred_fallthru
      _
    // Predicated region
    $region18: #{textcnn_forward.1} parent=1 // pred_check
      _
    $region19: #{textcnn_forward.1} parent=1 // pred_check_branch
      %29 = sbr.rel (0) target = $region21
    $region20: #{textcnn_forward.1} parent=1 // pred_region
      %30 = dma.done [#allocation3], 2048
    $region21: #{textcnn_forward.1} parent=1 // pred_fallthru
      _
    %v31 = vld [vmem:[%s0] sm:$0xff]
    %v32 = vlaneseq
    %v33 = vand.u32 %v32, 127
    %vm34 = vcmp.lt.s32.totalorder %v33, 0
    %v35 = vsub.s32 0, %v33
    %v36 = vsel %vm34, %v35, %v33
    %v37 = vshrl.u32 %v36, 4
    %v38 = vand.u32 %v36, 15
    %v39 = vsub.s32 0, %v38
    %v40 = vsel %vm34, %v39, %v38
    %vm41 = vcmp.ne.s32.totalorder %v40, 0
    %vm42 = vcmp.lt.s32.totalorder %v40, 0
    %vm43 = vmand %vm42, %vm41
    %v44 = vadd.s32 %v40, 16
    %v45 = vsel %vm43, %v44, %v40
    %vm46 = vcmp.eq.s32.totalorder %v31, %v45
    %v47 = vsel %vm46, 1, 0
    %v48 = vcvt.s32.f32 %v47
    %v49 = vld [vmem:[#allocation2] sm:$0xff]
    %v50 = vld [vmem:[#allocation2 + $0x8] sm:$0xff]
    %v51 = vld [vmem:[#allocation2 + $0x10] sm:$0xff]
    %v52 = vld [vmem:[#allocation2 + $0x18] sm:$0xff]
    %v53 = vld [vmem:[#allocation2 + $0x20] sm:$0xff]
    %v54 = vld [vmem:[#allocation2 + $0x28] sm:$0xff]
    %v55 = vld [vmem:[#allocation2 + $0x30] sm:$0xff]
    %v56 = vld [vmem:[#allocation2 + $0x38] sm:$0xff]
    %v57 = vld [vmem:[#allocation2 + $0x40] sm:$0xff]
    %v58 = vld [vmem:[#allocation2 + $0x48] sm:$0xff]
    %v59 = vld [vmem:[#allocation2 + $0x50] sm:$0xff]
    %v60 = vld [vmem:[#allocation2 + $0x58] sm:$0xff]
    %v61 = vld [vmem:[#allocation2 + $0x60] sm:$0xff]
    %v62 = vld [vmem:[#allocation2 + $0x68] sm:$0xff]
    %v63 = vld [vmem:[#allocation2 + $0x70] sm:$0xff]
    %v64 = vld [vmem:[#allocation2 + $0x78] sm:$0xff]
    %v65 = vld [vmem:[%s2] sm:$0x1]
    %v66 = vld [vmem:[%s2 + $0x1] sm:$0x1]
    %v67 = vld [vmem:[%s2 + $0x2] sm:$0x1]
    %v68 = vlaneseq
    %v69 = vshrl.u32 %v68, 7
    %v70 = vsub.s32 0, %v69
    %v71 = vrot.slane %v65, %v70
    %72 = vmatprep.subr.mxu0 0.0
    %73 = vmatpush1.msra.mxu0 %v49
    %74 = vmatprep.subr.mxu0 0.0
    %75 = vmatpush1.msra.mxu0 %v50
    %76 = vmatprep.subr.mxu0 0.0
    %77 = vmatpush1.msra.mxu0 %v51
    %78 = vmatprep.subr.mxu0 0.0
    %79 = vmatpush1.msra.mxu0 %v52
    %80 = vmatprep.subr.mxu0 0.0
    %81 = vmatpush1.msra.mxu0 %v53
    %82 = vmatprep.subr.mxu0 0.0
    %83 = vmatpush1.msra.mxu0 %v54
    %84 = vmatprep.subr.mxu0 0.0
    %85 = vmatpush1.msra.mxu0 %v55
    %86 = vmatprep.subr.mxu0 0.0
    %87 = vmatpush1.msra.mxu0 %v56
    %88 = vmatprep.subr.mxu0 0.0
    %89 = vmatpush1.msra.mxu0 %v57
    %90 = vmatprep.subr.mxu0 0.0
    %91 = vmatpush1.msra.mxu0 %v58
    %92 = vmatprep.subr.mxu0 0.0
    %93 = vmatpush1.msra.mxu0 %v59
    %94 = vmatprep.subr.mxu0 0.0
    %95 = vmatpush1.msra.mxu0 %v60
    %96 = vmatprep.subr.mxu0 0.0
    %97 = vmatpush1.msra.mxu0 %v61
    %98 = vmatprep.subr.mxu0 0.0
    %99 = vmatpush1.msra.mxu0 %v62
    %100 = vmatprep.subr.mxu0 0.0
    %101 = vmatpush1.msra.mxu0 %v63
    %102 = vmatprep.subr.mxu0 0.0
    %103 = vmatpush1.msra.mxu0 %v64
    %104 = vmatprep.subr.mxu0 0.0
    %105 = vmatpush1.msra.mxu0 0.0
    %106 = vmatprep.subr.mxu0 0.0
    %107 = vmatpush1.msra.mxu0 0.0
    %108 = vmatprep.subr.mxu0 0.0
    %109 = vmatpush1.msra.mxu0 0.0
    %110 = vmatprep.subr.mxu0 0.0
    %111 = vmatpush1.msra.mxu0 0.0
    %112 = vmatprep.subr.mxu0 0.0
    %113 = vmatpush1.msra.mxu0 0.0
    %114 = vmatprep.subr.mxu0 0.0
    %115 = vmatpush1.msra.mxu0 0.0
    %116 = vmatprep.subr.mxu0 0.0
    %117 = vmatpush1.msra.mxu0 0.0
    %118 = vmatprep.subr.mxu0 0.0
    %119 = vmatpush1.msra.mxu0 0.0
    %120 = vmatprep.subr.mxu0 0.0
    %121 = vmatpush1.msra.mxu0 0.0
    %122 = vmatprep.subr.mxu0 0.0
    %123 = vmatpush1.msra.mxu0 0.0
    %124 = vmatprep.subr.mxu0 0.0
    %125 = vmatpush1.msra.mxu0 0.0
    %126 = vmatprep.subr.mxu0 0.0
    %127 = vmatpush1.msra.mxu0 0.0
    %128 = vmatprep.subr.mxu0 0.0
    %129 = vmatpush1.msra.mxu0 0.0
    %130 = vmatprep.subr.mxu0 0.0
    %131 = vmatpush1.msra.mxu0 0.0
    %132 = vmatprep.subr.mxu0 0.0
    %133 = vmatpush1.msra.mxu0 0.0
    %134 = vmatprep.subr.mxu0 0.0
    %135 = vmatpush1.msra.mxu0 0.0
    %136 = vmatprep.mubr.f32.mxu0 0.0
    %137 = vmatmul.mubr.f32.gmra.mrb[0].mxu0 %v48
    %v138 = vpop.f32.mrb[0].mxu0
    %v139 = vadd.f32 %v71, %v138
    %v140 = vpop.f32.mrb[0].mxu0
    %141 = vdwg.mxu0
    %v142 = vmax.f32 %v139, 0.0
    %v143 = vlaneseq
    %v144 = vshrl.u32 %v143, 7
    %v145 = vsub.s32 0, %v144
    %v146 = vrot.slane %v66, %v145
    %v147 = vmul.f32 %v142, %v146
    %149 = vrot.lane.b32.xlu0 %v147, 112
    %v150 = vpop.permute.xlu0 %149
    %v152 = vmax.f32 %v147, %v150
    %153 = vrot.lane.b32.xlu0 %v147, 96
    %v154 = vpop.permute.xlu0 %153
    %v156 = vmax.f32 %v152, %v154
    %157 = vrot.lane.b32.xlu0 %v147, 80
    %v158 = vpop.permute.xlu0 %157
    %v160 = vmax.f32 %v156, %v158
    %161 = vrot.lane.b32.xlu0 %v147, 64
    %v162 = vpop.permute.xlu0 %161
    %v164 = vmax.f32 %v160, %v162
    %165 = vrot.lane.b32.xlu0 %v147, 48
    %v166 = vpop.permute.xlu0 %165
    %v168 = vmax.f32 %v164, %v166
    %169 = vrot.lane.b32.xlu0 %v147, 32
    %v170 = vpop.permute.xlu0 %169
    %v172 = vmax.f32 %v168, %v170
    %173 = vrot.lane.b32.xlu0 %v147, 16
    %v174 = vpop.permute.xlu0 %173
    %v176 = vmax.f32 %v172, %v174
    %v177 = vld [vmem:[%s3] sm:$0xff]
    %v178 = vld [vmem:[%s3 + $0x8] sm:$0xff]
    %v179 = vlaneseq
    %v180 = vshrl.u32 %v179, 7
    %v181 = vsub.s32 0, %v180
    %v182 = vrot.slane %v67, %v181
    %vm183 = vcmask 130048
    %v185 = vsel %vm183, %v176, 0
    %187 = vmatprep.subr.mxu0 0.0
    %188 = vmatpush1.msra.mxu0 %v177
    %189 = vmatprep.subr.mxu0 0.0
    %190 = vmatpush1.msra.mxu0 %v178
    %191 = vmatprep.subr.mxu0 0.0
    %192 = vmatpush1.msra.mxu0 0.0
    %193 = vmatprep.subr.mxu0 0.0
    %194 = vmatpush1.msra.mxu0 0.0
    %195 = vmatprep.subr.mxu0 0.0
    %196 = vmatpush1.msra.mxu0 0.0
    %197 = vmatprep.subr.mxu0 0.0
    %198 = vmatpush1.msra.mxu0 0.0
    %199 = vmatprep.subr.mxu0 0.0
    %200 = vmatpush1.msra.mxu0 0.0
    %201 = vmatprep.subr.mxu0 0.0
    %202 = vmatpush1.msra.mxu0 0.0
    %203 = vmatprep.subr.mxu0 0.0
    %204 = vmatpush1.msra.mxu0 0.0
    %205 = vmatprep.subr.mxu0 0.0
    %206 = vmatpush1.msra.mxu0 0.0
    %207 = vmatprep.subr.mxu0 0.0
    %208 = vmatpush1.msra.mxu0 0.0
    %209 = vmatprep.subr.mxu0 0.0
    %210 = vmatpush1.msra.mxu0 0.0
    %211 = vmatprep.subr.mxu0 0.0
    %212 = vmatpush1.msra.mxu0 0.0
    %213 = vmatprep.subr.mxu0 0.0
    %214 = vmatpush1.msra.mxu0 0.0
    %215 = vmatprep.subr.mxu0 0.0
    %216 = vmatpush1.msra.mxu0 0.0
    %217 = vmatprep.subr.mxu0 0.0
    %218 = vmatpush1.msra.mxu0 0.0
    %219 = vmatprep.subr.mxu0 0.0
    %220 = vmatpush1.msra.mxu0 0.0
    %221 = vmatprep.subr.mxu0 0.0
    %222 = vmatpush1.msra.mxu0 0.0
    %223 = vmatprep.subr.mxu0 0.0
    %224 = vmatpush1.msra.mxu0 0.0
    %225 = vmatprep.subr.mxu0 0.0
    %226 = vmatpush1.msra.mxu0 0.0
    %227 = vmatprep.subr.mxu0 0.0
    %228 = vmatpush1.msra.mxu0 0.0
    %229 = vmatprep.subr.mxu0 0.0
    %230 = vmatpush1.msra.mxu0 0.0
    %231 = vmatprep.subr.mxu0 0.0
    %232 = vmatpush1.msra.mxu0 0.0
    %233 = vmatprep.subr.mxu0 0.0
    %234 = vmatpush1.msra.mxu0 0.0
    %235 = vmatprep.subr.mxu0 0.0
    %236 = vmatpush1.msra.mxu0 0.0
    %237 = vmatprep.subr.mxu0 0.0
    %238 = vmatpush1.msra.mxu0 0.0
    %239 = vmatprep.subr.mxu0 0.0
    %240 = vmatpush1.msra.mxu0 0.0
    %241 = vmatprep.subr.mxu0 0.0
    %242 = vmatpush1.msra.mxu0 0.0
    %243 = vmatprep.subr.mxu0 0.0
    %244 = vmatpush1.msra.mxu0 0.0
    %245 = vmatprep.subr.mxu0 0.0
    %246 = vmatpush1.msra.mxu0 0.0
    %247 = vmatprep.subr.mxu0 0.0
    %248 = vmatpush1.msra.mxu0 0.0
    %249 = vmatprep.subr.mxu0 0.0
    %250 = vmatpush1.msra.mxu0 0.0
    %251 = vmatprep.mubr.f32.mxu0 0.0
    %252 = vmatmul.mubr.f32.gmra.mrb[0].mxu0 %v185
    %v253 = vpop.f32.mrb[0].mxu0
    %v254 = vadd.f32 %v182, %v253
    %v255 = vpop.f32.mrb[0].mxu0
    %256 = vdwg.mxu0
    %257 = vst [vmem:[%s4] sm:$0xff] %v254
    // Predicated region
    $region22: #{textcnn_forward.1} parent=1 // pred_check
      _
    $region23: #{textcnn_forward.1} parent=1 // pred_check_branch
      %259 = sbr.rel (0) target = $region25
    $region24: #{textcnn_forward.1} parent=1 // pred_region
      _
    $region25: #{textcnn_forward.1} parent=1 // pred_fallthru
      _
    // Predicated region
    $region26: #{textcnn_forward.1} parent=1 // pred_check
      _
    $region27: #{textcnn_forward.1} parent=1 // pred_check_branch
      %261 = sbr.rel (0) target = $region29
    $region28: #{textcnn_forward.1} parent=1 // pred_region
      _
    $region29: #{textcnn_forward.1} parent=1 // pred_fallthru
      _
    %262 = vsyncpa [#allocation3], 1

</llo_original>
